<compile_context>
chip_gen: v7x
topology: tpu7x:2x2x1
jax: 0.10.0
libtpu: 0.0.40
codegen_flags: <defaults>
</compile_context>

<pallas_src>
import jax
import jax.numpy as jnp
from jax.experimental import pallas as pl
from jax.experimental.pallas import tpu as pltpu


def cat_dup_kernel(x1_ref, x2_ref, x3_ref, o_ref):
    # x*_ref: (n, c_i, h*w)   o_ref: (n, C, h*w)  (copy axis squeezed out)
    c1 = x1_ref.shape[1]
    c2 = x2_ref.shape[1]
    c3 = x3_ref.shape[1]
    o_ref[:, 0:c1, :] = x1_ref[...]
    o_ref[:, c1:c1 + c2, :] = x2_ref[...]
    o_ref[:, c1 + c2:c1 + c2 + c3, :] = x3_ref[...]


def model_forward(x1, x2, x3):
    assert x1.dtype == x2.dtype == x3.dtype, "inputs must share a dtype"
    n, c1, h, w = x1.shape
    c2 = x2.shape[1]
    c3 = x3.shape[1]
    C = c1 + c2 + c3
    hw = h * w

    # Flatten spatial dims onto the lane axis (lane-dense stores).
    x1f = x1.reshape(n, c1, hw)
    x2f = x2.reshape(n, c2, hw)
    x3f = x3.reshape(n, c3, hw)

    itemsize = jnp.dtype(x1.dtype).itemsize
    # read v1 once (inputs resident across the grid) + write it twice
    bytes_accessed = 3 * n * C * hw * itemsize

    # Output laid out as (n, 2, C, hw): copy axis is a leading "which copy"
    # dim so each grid step writes one full-channel, full-lane block whose
    # trailing dims equal the array dims (satisfies the (8,128) rule), and the
    # final reshape to (n, 2C, h, w) is a pure contiguous reshape.
    out = pl.pallas_call(
        cat_dup_kernel,
        out_shape=jax.ShapeDtypeStruct((n, 2, C, hw), x1.dtype),
        grid=(2,),
        in_specs=[
            pl.BlockSpec((n, c1, hw), lambda r: (0, 0, 0)),
            pl.BlockSpec((n, c2, hw), lambda r: (0, 0, 0)),
            pl.BlockSpec((n, c3, hw), lambda r: (0, 0, 0)),
        ],
        out_specs=pl.BlockSpec((n, None, C, hw), lambda r: (0, r, 0, 0)),
        compiler_params=pltpu.CompilerParams(
            dimension_semantics=("arbitrary",)),
        cost_estimate=pl.CostEstimate(
            flops=0, transcendentals=0, bytes_accessed=bytes_accessed),
    )(x1f, x2f, x3f)

    return out.reshape(n, 2 * C, h, w)


if __name__ == "__main__":
    key = jax.random.PRNGKey(0)
    k1, k2, k3 = jax.random.split(key, 3)
    # shapes implied by the module's example inputs
    x1 = jax.random.normal(k1, (1, 7, 46, 46), dtype=jnp.float32)
    x2 = jax.random.normal(k2, (1, 4, 46, 46), dtype=jnp.float32)
    x3 = jax.random.normal(k3, (1, 16, 46, 46), dtype=jnp.float32)

    out = model_forward(x1, x2, x3)
    out = jax.block_until_ready(out)

    # reference check
    v1 = jnp.concatenate([x1, x2, x3], axis=1)
    ref = jnp.concatenate([v1, v1], axis=1)
    assert out.shape == (1, 54, 46, 46)
    assert jnp.array_equal(out, ref)

    print("KERNEL_OK")
</pallas_src>

<mosaic_0001>
module attributes {stable_mosaic.version = 11 : i64} {
  func.func @cat_dup_kernel(%arg0: i32, %arg1: memref<1x7x2116xf32, #tpu.memory_space<vmem>>, %arg2: memref<1x4x2116xf32, #tpu.memory_space<vmem>>, %arg3: memref<1x16x2116xf32, #tpu.memory_space<vmem>>, %arg4: memref<1x1x27x2116xf32, #tpu.memory_space<vmem>>) attributes {dimension_semantics = [#tpu.dimension_semantics<arbitrary>], iteration_bounds = array<i64: 2>, scalar_prefetch = 0 : i64, scratch_operands = 0 : i64, tpu.core_type = #tpu.core_type<tc>, window_params = [{pipeline_mode = #tpu.pipeline_mode<synchronous>, transform_indices = @transform_0, window_bounds = array<i64: 1, 7, 2116>}, {pipeline_mode = #tpu.pipeline_mode<synchronous>, transform_indices = @transform_1, window_bounds = array<i64: 1, 4, 2116>}, {pipeline_mode = #tpu.pipeline_mode<synchronous>, transform_indices = @transform_2, window_bounds = array<i64: 1, 16, 2116>}, {transform_indices = @transform_3, window_bounds = array<i64: 1, 1, 27, 2116>}]} {
    %c0 = arith.constant 0 : index
    %c0_0 = arith.constant 0 : index
    %c0_1 = arith.constant 0 : index
    %0 = vector.load %arg1[%c0, %c0_0, %c0_1] : memref<1x7x2116xf32, #tpu.memory_space<vmem>>, vector<1x7x2116xf32>
    %c0_2 = arith.constant 0 : index
    %c0_3 = arith.constant 0 : index
    %c0_4 = arith.constant 0 : index
    %c0_5 = arith.constant 0 : index
    %1 = vector.load %arg4[%c0_2, %c0_3, %c0_4, %c0_5] : memref<1x1x27x2116xf32, #tpu.memory_space<vmem>>, vector<1x1x7x2116xf32>
    %2 = vector.shape_cast %1 : vector<1x1x7x2116xf32> to vector<1x7x2116xf32>
    %3 = vector.shape_cast %0 : vector<1x7x2116xf32> to vector<1x1x7x2116xf32>
    tpu.vector_store %arg4[%c0_2, %c0_3, %c0_4, %c0_5], %3 {strides = array<i32>} : memref<1x1x27x2116xf32, #tpu.memory_space<vmem>>, vector<1x1x7x2116xf32>,
    %c0_6 = arith.constant 0 : index
    %c0_7 = arith.constant 0 : index
    %c0_8 = arith.constant 0 : index
    %4 = vector.load %arg2[%c0_6, %c0_7, %c0_8] : memref<1x4x2116xf32, #tpu.memory_space<vmem>>, vector<1x4x2116xf32>
    %c0_9 = arith.constant 0 : index
    %c0_10 = arith.constant 0 : index
    %c7 = arith.constant 7 : index
    %c0_11 = arith.constant 0 : index
    %5 = vector.load %arg4[%c0_9, %c0_10, %c7, %c0_11] : memref<1x1x27x2116xf32, #tpu.memory_space<vmem>>, vector<1x1x4x2116xf32>
    %6 = vector.shape_cast %5 : vector<1x1x4x2116xf32> to vector<1x4x2116xf32>
    %7 = vector.shape_cast %4 : vector<1x4x2116xf32> to vector<1x1x4x2116xf32>
    tpu.vector_store %arg4[%c0_9, %c0_10, %c7, %c0_11], %7 {strides = array<i32>} : memref<1x1x27x2116xf32, #tpu.memory_space<vmem>>, vector<1x1x4x2116xf32>,
    %c0_12 = arith.constant 0 : index
    %c0_13 = arith.constant 0 : index
    %c0_14 = arith.constant 0 : index
    %8 = vector.load %arg3[%c0_12, %c0_13, %c0_14] : memref<1x16x2116xf32, #tpu.memory_space<vmem>>, vector<1x16x2116xf32>
    %c0_15 = arith.constant 0 : index
    %c0_16 = arith.constant 0 : index
    %c11 = arith.constant 11 : index
    %c0_17 = arith.constant 0 : index
    %9 = vector.load %arg4[%c0_15, %c0_16, %c11, %c0_17] : memref<1x1x27x2116xf32, #tpu.memory_space<vmem>>, vector<1x1x16x2116xf32>
    %10 = vector.shape_cast %9 : vector<1x1x16x2116xf32> to vector<1x16x2116xf32>
    %11 = vector.shape_cast %8 : vector<1x16x2116xf32> to vector<1x1x16x2116xf32>
    tpu.vector_store %arg4[%c0_15, %c0_16, %c11, %c0_17], %11 {strides = array<i32>} : memref<1x1x27x2116xf32, #tpu.memory_space<vmem>>, vector<1x1x16x2116xf32>,
    return
  }
  func.func @transform_0(%arg0: i32) -> (i32, i32, i32) {
    %c0_i32 = arith.constant 0 : i32
    %c0_i32_0 = arith.constant 0 : i32
    %c0_i32_1 = arith.constant 0 : i32
    %c0_i32_2 = arith.constant 0 : i32
    return %c0_i32, %c0_i32_0, %c0_i32_1 : i32, i32, i32
  }
  func.func @transform_1(%arg0: i32) -> (i32, i32, i32) {
    %c0_i32 = arith.constant 0 : i32
    %c0_i32_0 = arith.constant 0 : i32
    %c0_i32_1 = arith.constant 0 : i32
    %c0_i32_2 = arith.constant 0 : i32
    return %c0_i32, %c0_i32_0, %c0_i32_1 : i32, i32, i32
  }
  func.func @transform_2(%arg0: i32) -> (i32, i32, i32) {
    %c0_i32 = arith.constant 0 : i32
    %c0_i32_0 = arith.constant 0 : i32
    %c0_i32_1 = arith.constant 0 : i32
    %c0_i32_2 = arith.constant 0 : i32
    return %c0_i32, %c0_i32_0, %c0_i32_1 : i32, i32, i32
  }
  func.func @transform_3(%arg0: i32) -> (i32, i32, i32, i32) {
    %c0_i32 = arith.constant 0 : i32
    %c0_i32_0 = arith.constant 0 : i32
    %c0_i32_1 = arith.constant 0 : i32
    %c0_i32_2 = arith.constant 0 : i32
    return %c0_i32, %arg0, %c0_i32_0, %c0_i32_1 : i32, i32, i32, i32
  }
}

</mosaic_0001>

<llo_original>
// kernel: tpu_custom_call.1
$region0: #{tpu_custom_call.1}
  #allocation0 [shape = 'u32[]', space=smem, size = 0x4, offset = 0x4, fixed_abs, tag = 'smem constant byte address 0x4 - core index']
  #allocation1 [shape = 'u32[144,128]{1,0:T(1,128)}', space=vmem, size = 0x12000, scoped, tag = 'internal scratch']
  %s0 = inlined_call_operand.vmem [shape: f32[1,7,2116], index: 0, kind: input, shape index: {}]
  %s1 = inlined_call_operand.vmem [shape: f32[1,4,2116], index: 1, kind: input, shape index: {}]
  %s2 = inlined_call_operand.hbm [shape: f32[1,16,2116], index: 2, kind: input, shape index: {}]
  %s3 = inlined_call_operand.vmem [shape: f32[1,2,27,2116], index: 3, kind: output, shape index: {}]
  %s4 = sld [smem:[#allocation0]]
  $region49: #{tpu_custom_call.1} parent=0
    _
  %s6 = ssub.s32 1, %s4
  %s7 = scalar_select 0, %s6, %s4
  $region1: #{tpu_custom_call.1} parent=0
    #allocation2 [shape = 'u8[139264]{0}', space=vmem, size = 0x22000, scoped, tag = 'input window, operand 2, single buffered']
    #allocation3 [shape = 's32[2]{0}', space=sflag, size = 0x8, scoped, tag = 'scoped memory for tpu_custom_call.1']
    %8 = vsyncpa [#allocation3], 0
    loop: start=0, step=1, limit=4
    $region2: #{tpu_custom_call.1} parent=1 // loop_pre_header
      _
    $region3: #{tpu_custom_call.1} parent=1 // loop_header
      %s10 = sphi 0, %s14
      %p11 = scmp.ge.s32.totalorder %s10, 4
      %s18 = sphi 0, %s18
      %s20 = sphi 0, %s18
      %s21 = sphi 0, %s20
      %s35 = sphi 0, %s21
      %s39 = sphi 0, %s39
      %s41 = sphi 0, %s39
      %s42 = sphi 0, %s41
      %s56 = sphi 0, %s42
      %s60 = sphi 0, %s60
      %s62 = sphi 0, %s60
      %s63 = sphi 0, %s62
      %s77 = sphi 0, %s63
      %s83 = sphi 0, %s85
      %s86 = sphi 0, %s83
      %s87 = sphi 0, %s86
      %s103 = sphi 0, %s87
    $region4: #{tpu_custom_call.1} parent=1 // loop_header_branch
      %13 = sbr.rel (%p11) target = $region8
    $region5: #{tpu_custom_call.1} parent=1 // loop_body
      %s15 = ssub.s32 %s10, 1
      %s16 = ssub.s32 %s10, 2
      %s17 = sadd.s32 %s10, 1
      %s19 = sadd.s32 %s18, 1
      %p22 = scmp.eq.s32.totalorder %s10, 1
      %p23 = scmp.ne.s32.totalorder %s18, %s20
      %p24 = scmp.eq.s32.totalorder %s10, 0
      %p25 = por %p23, %p24
      %p26 = scmp.ne.s32.totalorder %s18, %s20
      %p27 = scmp.eq.s32.totalorder %s15, 1
      %p28 = por %p26, %p27
      %p29 = scmp.ne.s32.totalorder %s20, %s21
      %p30 = scmp.eq.s32.totalorder %s15, 0
      %p31 = por %p29, %p30
      %p32 = scmp.ne.s32.totalorder %s20, %s21
      %p33 = scmp.eq.s32.totalorder %s16, 1
      %p34 = por %p32, %p33
      %p36 = scmp.ne.s32.totalorder %s21, %s35
      %p37 = scmp.eq.s32.totalorder %s16, 0
      %p38 = por %p36, %p37
      %s40 = sadd.s32 %s39, 1
      %p43 = scmp.eq.s32.totalorder %s10, 1
      %p44 = scmp.ne.s32.totalorder %s39, %s41
      %p45 = scmp.eq.s32.totalorder %s10, 0
      %p46 = por %p44, %p45
      %p47 = scmp.ne.s32.totalorder %s39, %s41
      %p48 = scmp.eq.s32.totalorder %s15, 1
      %p49 = por %p47, %p48
      %p50 = scmp.ne.s32.totalorder %s41, %s42
      %p51 = scmp.eq.s32.totalorder %s15, 0
      %p52 = por %p50, %p51
      %p53 = scmp.ne.s32.totalorder %s41, %s42
      %p54 = scmp.eq.s32.totalorder %s16, 1
      %p55 = por %p53, %p54
      %p57 = scmp.ne.s32.totalorder %s42, %s56
      %p58 = scmp.eq.s32.totalorder %s16, 0
      %p59 = por %p57, %p58
      %s61 = sadd.s32 %s60, 1
      %p64 = scmp.eq.s32.totalorder %s10, 1
      %p65 = scmp.ne.s32.totalorder %s60, %s62
      %p66 = scmp.eq.s32.totalorder %s10, 0
      %p67 = por %p65, %p66
      %p68 = scmp.ne.s32.totalorder %s60, %s62
      %p69 = scmp.eq.s32.totalorder %s15, 1
      %p70 = por %p68, %p69
      %p71 = scmp.ne.s32.totalorder %s62, %s63
      %p72 = scmp.eq.s32.totalorder %s15, 0
      %p73 = por %p71, %p72
      %p74 = scmp.ne.s32.totalorder %s62, %s63
      %p75 = scmp.eq.s32.totalorder %s16, 1
      %p76 = por %p74, %p75
      %p78 = scmp.ne.s32.totalorder %s63, %s77
      %p79 = scmp.eq.s32.totalorder %s16, 0
      %p80 = por %p78, %p79
      %s81 = ssub.s32 %s10, %s17
      %p82 = scmp.eq.s32.totalorder %s81, 0
      %s84 = sadd.s32 %s83, 1
      %s85 = scalar_select %p82, %s83, %s84
      %p88 = pneg %p82
      %p89 = scmp.eq.s32.totalorder %s10, 1
      %p90 = por %p88, %p89
      %p91 = scmp.ne.s32.totalorder %s83, %s86
      %p92 = scmp.eq.s32.totalorder %s10, 0
      %p93 = por %p91, %p92
      %p94 = scmp.ne.s32.totalorder %s83, %s86
      %p95 = scmp.eq.s32.totalorder %s15, 1
      %p96 = por %p94, %p95
      %p97 = scmp.ne.s32.totalorder %s86, %s87
      %p98 = scmp.eq.s32.totalorder %s15, 0
      %p99 = por %p97, %p98
      %p100 = scmp.ne.s32.totalorder %s86, %s87
      %p101 = scmp.eq.s32.totalorder %s16, 1
      %p102 = por %p100, %p101
      %p104 = scmp.ne.s32.totalorder %s87, %s103
      %p105 = scmp.eq.s32.totalorder %s16, 0
      %p106 = por %p104, %p105
      %p107 = scmp.le.s32.totalorder 1, %s10
      %p108 = scmp.lt.s32.totalorder %s10, 3
      %p109 = pnand %p107, %p108
      %p110 = pneg %p109
      // Predicated region
      $region9: #{tpu_custom_call.1} parent=5 // pred_check
        _
      $region10: #{tpu_custom_call.1} parent=5 // pred_check_branch
        %112 = sbr.rel (%p109) target = $region12
      $region11: #{tpu_custom_call.1} parent=5 // pred_region
        %s113 = ssub.s32 %s10, 1
        // Predicated region
        $region13: #{tpu_custom_call.1} parent=11 // pred_check
          %p114 = pneg %p31
        $region14: #{tpu_custom_call.1} parent=11 // pred_check_branch
          %116 = sbr.rel (%p114) target = $region16
        $region15: #{tpu_custom_call.1} parent=11 // pred_region
          _
        $region16: #{tpu_custom_call.1} parent=11 // pred_fallthru
          _
        // Predicated region
        $region17: #{tpu_custom_call.1} parent=11 // pred_check
          %p117 = pneg %p52
        $region18: #{tpu_custom_call.1} parent=11 // pred_check_branch
          %119 = sbr.rel (%p117) target = $region20
        $region19: #{tpu_custom_call.1} parent=11 // pred_region
          _
        $region20: #{tpu_custom_call.1} parent=11 // pred_fallthru
          _
        // Predicated region
        $region21: #{tpu_custom_call.1} parent=11 // pred_check
          %p120 = pneg %p73
        $region22: #{tpu_custom_call.1} parent=11 // pred_check_branch
          %122 = sbr.rel (%p120) target = $region24
        $region23: #{tpu_custom_call.1} parent=11 // pred_region
          %s124 = ssub.s32 4352, 4352
          %125 = vsyncadd [#allocation3], %s124
          %s126 = sshll.u32 [#allocation2], 4
          %s127 = int_to_ptr.vmem [resolvable:$true] %s126
          %132 = dma.hbm_to_vmem [thread:$0]  %s2, 4352, %s127, [#allocation3], 2176, 2176, 136
        $region24: #{tpu_custom_call.1} parent=11 // pred_fallthru
          _
      $region12: #{tpu_custom_call.1} parent=5 // pred_fallthru
        _
      %p133 = scmp.lt.s32.totalorder %s10, 2
      // Predicated region
      $region25: #{tpu_custom_call.1} parent=5 // pred_check
        %p134 = pneg %p133
      $region26: #{tpu_custom_call.1} parent=5 // pred_check_branch
        %136 = sbr.rel (%p134) target = $region28
      $region27: #{tpu_custom_call.1} parent=5 // pred_region
        _
      $region28: #{tpu_custom_call.1} parent=5 // pred_fallthru
        _
      %p137 = scmp.le.s32.totalorder 1, %s10
      %p138 = scmp.lt.s32.totalorder %s10, 3
      %p139 = pnand %p137, %p138
      %p140 = pneg %p139
      // Predicated region
      $region29: #{tpu_custom_call.1} parent=5 // pred_check
        _
      $region30: #{tpu_custom_call.1} parent=5 // pred_check_branch
        %142 = sbr.rel (%p139) target = $region32
      $region31: #{tpu_custom_call.1} parent=5 // pred_region
        %s143 = ssub.s32 %s10, 1
        // Predicated region
        $region33: #{tpu_custom_call.1} parent=31 // pred_check
          %p144 = pneg %p73
        $region34: #{tpu_custom_call.1} parent=31 // pred_check_branch
          %146 = sbr.rel (%p144) target = $region36
        $region35: #{tpu_custom_call.1} parent=31 // pred_region
          %147 = dma.done [#allocation3], 4352
        $region36: #{tpu_custom_call.1} parent=31 // pred_fallthru
          _
        %p148 = pneg %p31
        %p149 = pneg %p28
        %p150 = pneg %p52
        %p151 = pneg %p49
        %p152 = pneg %p73
        %p153 = pneg %p70
        %p154 = pneg %p99
        %p155 = pneg %p96
        %p156 = scmp.lt.s32.totalorder %s15, 1
        %s157 = scalar_select %p156, %s15, 1
        %s158 = smul.addr %s157, 68
        %s159 = smul.addr %s158, 8
        %s160 = scalar_lea.vmem %s3, %s159
        %p161 = scmp.lt.s32.totalorder %s15, 1
        %s162 = scalar_select %p161, %s15, 1
        %s163 = smul.addr %s162, 68
        %s164 = smul.addr %s163, 8
        %s165 = scalar_lea.vmem %s3, %s164
        %v166 = vld [vmem:[%s0] sm:$0x7f]
        %v167 = vld [vmem:[%s0 + $0x8] sm:$0x7f]
        %v168 = vld [vmem:[%s0 + $0x10] sm:$0x7f]
        %v169 = vld [vmem:[%s0 + $0x18] sm:$0x7f]
        %v170 = vld [vmem:[%s0 + $0x20] sm:$0x7f]
        %v171 = vld [vmem:[%s0 + $0x28] sm:$0x7f]
        %v172 = vld [vmem:[%s0 + $0x30] sm:$0x7f]
        %v173 = vld [vmem:[%s0 + $0x38] sm:$0x7f]
        %v174 = vld [vmem:[%s0 + $0x40] sm:$0x7f]
        %v175 = vld [vmem:[%s0 + $0x48] sm:$0x7f]
        %v176 = vld [vmem:[%s0 + $0x50] sm:$0x7f]
        %v177 = vld [vmem:[%s0 + $0x58] sm:$0x7f]
        %v178 = vld [vmem:[%s0 + $0x60] sm:$0x7f]
        %v179 = vld [vmem:[%s0 + $0x68] sm:$0x7f]
        %v180 = vld [vmem:[%s0 + $0x70] sm:$0x7f]
        %v181 = vld [vmem:[%s0 + $0x78] sm:$0x7f]
        %v182 = vld [vmem:[%s0 + $0x80] sm:$0x7f]
        %183 = vst [vmem:[%s165] sm:$0x7f] %v166
        %184 = vst [vmem:[%s165 + $0x8] sm:$0x7f] %v167
        %185 = vst [vmem:[%s165 + $0x10] sm:$0x7f] %v168
        %186 = vst [vmem:[%s165 + $0x18] sm:$0x7f] %v169
        %187 = vst [vmem:[%s165 + $0x20] sm:$0x7f] %v170
        %188 = vst [vmem:[%s165 + $0x28] sm:$0x7f] %v171
        %189 = vst [vmem:[%s165 + $0x30] sm:$0x7f] %v172
        %190 = vst [vmem:[%s165 + $0x38] sm:$0x7f] %v173
        %191 = vst [vmem:[%s165 + $0x40] sm:$0x7f] %v174
        %192 = vst [vmem:[%s165 + $0x48] sm:$0x7f] %v175
        %193 = vst [vmem:[%s165 + $0x50] sm:$0x7f] %v176
        %194 = vst [vmem:[%s165 + $0x58] sm:$0x7f] %v177
        %195 = vst [vmem:[%s165 + $0x60] sm:$0x7f] %v178
        %196 = vst [vmem:[%s165 + $0x68] sm:$0x7f] %v179
        %197 = vst [vmem:[%s165 + $0x70] sm:$0x7f] %v180
        %198 = vst [vmem:[%s165 + $0x78] sm:$0x7f] %v181
        %vm199 = vcmask 555008
        %200 = vst.msk [vmem:[%s165 + $0x80] sm:$0x7f] %vm199, %v182
        %v201 = vld [vmem:[%s1] sm:$0xff]
        %v202 = vld [vmem:[%s1 + $0x8] sm:$0xff]
        %v203 = vld [vmem:[%s1 + $0x10] sm:$0xff]
        %v204 = vld [vmem:[%s1 + $0x18] sm:$0xff]
        %v205 = vld [vmem:[%s1 + $0x20] sm:$0xff]
        %v206 = vld [vmem:[%s1 + $0x28] sm:$0xff]
        %v207 = vld [vmem:[%s1 + $0x30] sm:$0xff]
        %v208 = vld [vmem:[%s1 + $0x38] sm:$0xff]
        %v209 = vld [vmem:[%s1 + $0x40] sm:$0xf]
        %v219 = vcombine.high %v201, %v201
        %v220 = vcombine.high %v202, %v202
        %v221 = vcombine.high %v203, %v203
        %v222 = vcombine.high %v204, %v204
        %v223 = vcombine.high %v205, %v205
        %v224 = vcombine.high %v206, %v206
        %v225 = vcombine.high %v207, %v207
        %v226 = vcombine.high %v208, %v208
        %v227 = vrot.slane %v201, 1
        %v228 = vrot.slane %v219, 1
        %v229 = vrot.slane %v202, 1
        %v230 = vrot.slane %v220, 1
        %v231 = vrot.slane %v203, 1
        %v232 = vrot.slane %v221, 1
        %v233 = vrot.slane %v204, 1
        %v234 = vrot.slane %v222, 1
        %v235 = vrot.slane %v205, 1
        %v236 = vrot.slane %v223, 1
        %v237 = vrot.slane %v206, 1
        %v238 = vrot.slane %v224, 1
        %v239 = vrot.slane %v207, 1
        %v240 = vrot.slane %v225, 1
        %v241 = vrot.slane %v208, 1
        %v242 = vrot.slane %v226, 1
        %v243 = vrot.slane %v209, 1
        %261 = vst [vmem:[%s165] sm:$0x80] %v227
        %262 = vst [vmem:[%s165 + $0x8] sm:$0x80] %v228
        %263 = vst [vmem:[%s165 + $0x10] sm:$0x80] %v229
        %264 = vst [vmem:[%s165 + $0x18] sm:$0x80] %v230
        %265 = vst [vmem:[%s165 + $0x20] sm:$0x80] %v231
        %266 = vst [vmem:[%s165 + $0x28] sm:$0x80] %v232
        %267 = vst [vmem:[%s165 + $0x30] sm:$0x80] %v233
        %268 = vst [vmem:[%s165 + $0x38] sm:$0x80] %v234
        %269 = vst [vmem:[%s165 + $0x40] sm:$0x80] %v235
        %270 = vst [vmem:[%s165 + $0x48] sm:$0x80] %v236
        %271 = vst [vmem:[%s165 + $0x50] sm:$0x80] %v237
        %272 = vst [vmem:[%s165 + $0x58] sm:$0x80] %v238
        %273 = vst [vmem:[%s165 + $0x60] sm:$0x80] %v239
        %274 = vst [vmem:[%s165 + $0x68] sm:$0x80] %v240
        %275 = vst [vmem:[%s165 + $0x70] sm:$0x80] %v241
        %276 = vst [vmem:[%s165 + $0x78] sm:$0x80] %v242
        %vm277 = vcmask 556039
        %278 = vst.msk [vmem:[%s165 + $0x80] sm:$0x80] %vm277, %v243
        %279 = vst [vmem:[%s165 + $0x88] sm:$0x7] %v227
        %280 = vst [vmem:[%s165 + $0x90] sm:$0x7] %v228
        %281 = vst [vmem:[%s165 + $0x98] sm:$0x7] %v229
        %282 = vst [vmem:[%s165 + $0xa0] sm:$0x7] %v230
        %283 = vst [vmem:[%s165 + $0xa8] sm:$0x7] %v231
        %284 = vst [vmem:[%s165 + $0xb0] sm:$0x7] %v232
        %285 = vst [vmem:[%s165 + $0xb8] sm:$0x7] %v233
        %286 = vst [vmem:[%s165 + $0xc0] sm:$0x7] %v234
        %287 = vst [vmem:[%s165 + $0xc8] sm:$0x7] %v235
        %288 = vst [vmem:[%s165 + $0xd0] sm:$0x7] %v236
        %289 = vst [vmem:[%s165 + $0xd8] sm:$0x7] %v237
        %290 = vst [vmem:[%s165 + $0xe0] sm:$0x7] %v238
        %291 = vst [vmem:[%s165 + $0xe8] sm:$0x7] %v239
        %292 = vst [vmem:[%s165 + $0xf0] sm:$0x7] %v240
        %293 = vst [vmem:[%s165 + $0xf8] sm:$0x7] %v241
        %294 = vst [vmem:[%s165 + $0x100] sm:$0x7] %v242
        %vm295 = vcmask 550912
        %296 = vst.msk [vmem:[%s165 + $0x108] sm:$0x7] %vm295, %v243
        %v297 = vld [vmem:[#allocation2] sm:$0xff]
        %v298 = vld [vmem:[#allocation2 + $0x8] sm:$0xff]
        %v299 = vld [vmem:[#allocation2 + $0x10] sm:$0xff]
        %v300 = vld [vmem:[#allocation2 + $0x18] sm:$0xff]
        %v301 = vld [vmem:[#allocation2 + $0x20] sm:$0xff]
        %v302 = vld [vmem:[#allocation2 + $0x28] sm:$0xff]
        %v303 = vld [vmem:[#allocation2 + $0x30] sm:$0xff]
        %v304 = vld [vmem:[#allocation2 + $0x38] sm:$0xff]
        %v305 = vld [vmem:[#allocation2 + $0x40] sm:$0xff]
        %v306 = vld [vmem:[#allocation2 + $0x48] sm:$0xff]
        %v307 = vld [vmem:[#allocation2 + $0x50] sm:$0xff]
        %v308 = vld [vmem:[#allocation2 + $0x58] sm:$0xff]
        %v309 = vld [vmem:[#allocation2 + $0x60] sm:$0xff]
        %v310 = vld [vmem:[#allocation2 + $0x68] sm:$0xff]
        %v311 = vld [vmem:[#allocation2 + $0x70] sm:$0xff]
        %v312 = vld [vmem:[#allocation2 + $0x78] sm:$0xff]
        %v313 = vld [vmem:[#allocation2 + $0x80] sm:$0xff]
        %v314 = vld [vmem:[#allocation2 + $0x88] sm:$0xff]
        %v315 = vld [vmem:[#allocation2 + $0x90] sm:$0xff]
        %v316 = vld [vmem:[#allocation2 + $0x98] sm:$0xff]
        %v317 = vld [vmem:[#allocation2 + $0xa0] sm:$0xff]
        %v318 = vld [vmem:[#allocation2 + $0xa8] sm:$0xff]
        %v319 = vld [vmem:[#allocation2 + $0xb0] sm:$0xff]
        %v320 = vld [vmem:[#allocation2 + $0xb8] sm:$0xff]
        %v321 = vld [vmem:[#allocation2 + $0xc0] sm:$0xff]
        %v322 = vld [vmem:[#allocation2 + $0xc8] sm:$0xff]
        %v323 = vld [vmem:[#allocation2 + $0xd0] sm:$0xff]
        %v324 = vld [vmem:[#allocation2 + $0xd8] sm:$0xff]
        %v325 = vld [vmem:[#allocation2 + $0xe0] sm:$0xff]
        %v326 = vld [vmem:[#allocation2 + $0xe8] sm:$0xff]
        %v327 = vld [vmem:[#allocation2 + $0xf0] sm:$0xff]
        %v328 = vld [vmem:[#allocation2 + $0xf8] sm:$0xff]
        %v329 = vld [vmem:[#allocation2 + $0x100] sm:$0xff]
        %v330 = vld [vmem:[#allocation2 + $0x108] sm:$0xff]
        %vm365 = vcmask 1042432
        %v366 = vrot.slane %v297, 5
        %v367 = vrot.slane %v298, 5
        %v368 = vrot.slane %v299, 5
        %v369 = vrot.slane %v300, 5
        %v370 = vrot.slane %v301, 5
        %v371 = vrot.slane %v302, 5
        %v372 = vrot.slane %v303, 5
        %v373 = vrot.slane %v304, 5
        %v374 = vrot.slane %v305, 5
        %v375 = vrot.slane %v306, 5
        %v376 = vrot.slane %v307, 5
        %v377 = vrot.slane %v308, 5
        %v378 = vrot.slane %v309, 5
        %v379 = vrot.slane %v310, 5
        %v380 = vrot.slane %v311, 5
        %v381 = vrot.slane %v312, 5
        %v382 = vrot.slane %v313, 5
        %v383 = vrot.slane %v314, 5
        %v384 = vsel %vm365, %v366, %v383
        %v385 = vrot.slane %v315, 5
        %v386 = vsel %vm365, %v367, %v385
        %v387 = vrot.slane %v316, 5
        %v388 = vsel %vm365, %v368, %v387
        %v389 = vrot.slane %v317, 5
        %v390 = vsel %vm365, %v369, %v389
        %v391 = vrot.slane %v318, 5
        %v392 = vsel %vm365, %v370, %v391
        %v393 = vrot.slane %v319, 5
        %v394 = vsel %vm365, %v371, %v393
        %v395 = vrot.slane %v320, 5
        %v396 = vsel %vm365, %v372, %v395
        %v397 = vrot.slane %v321, 5
        %v398 = vsel %vm365, %v373, %v397
        %v399 = vrot.slane %v322, 5
        %v400 = vsel %vm365, %v374, %v399
        %v401 = vrot.slane %v323, 5
        %v402 = vsel %vm365, %v375, %v401
        %v403 = vrot.slane %v324, 5
        %v404 = vsel %vm365, %v376, %v403
        %v405 = vrot.slane %v325, 5
        %v406 = vsel %vm365, %v377, %v405
        %v407 = vrot.slane %v326, 5
        %v408 = vsel %vm365, %v378, %v407
        %v409 = vrot.slane %v327, 5
        %v410 = vsel %vm365, %v379, %v409
        %v411 = vrot.slane %v328, 5
        %v412 = vsel %vm365, %v380, %v411
        %v413 = vrot.slane %v329, 5
        %v414 = vsel %vm365, %v381, %v413
        %v415 = vrot.slane %v330, 5
        %v416 = vsel %vm365, %v382, %v415
        %468 = vst [vmem:[%s165 + $0x88] sm:$0xf8] %v366
        %469 = vst [vmem:[%s165 + $0x90] sm:$0xf8] %v367
        %470 = vst [vmem:[%s165 + $0x98] sm:$0xf8] %v368
        %471 = vst [vmem:[%s165 + $0xa0] sm:$0xf8] %v369
        %472 = vst [vmem:[%s165 + $0xa8] sm:$0xf8] %v370
        %473 = vst [vmem:[%s165 + $0xb0] sm:$0xf8] %v371
        %474 = vst [vmem:[%s165 + $0xb8] sm:$0xf8] %v372
        %475 = vst [vmem:[%s165 + $0xc0] sm:$0xf8] %v373
        %476 = vst [vmem:[%s165 + $0xc8] sm:$0xf8] %v374
        %477 = vst [vmem:[%s165 + $0xd0] sm:$0xf8] %v375
        %478 = vst [vmem:[%s165 + $0xd8] sm:$0xf8] %v376
        %479 = vst [vmem:[%s165 + $0xe0] sm:$0xf8] %v377
        %480 = vst [vmem:[%s165 + $0xe8] sm:$0xf8] %v378
        %481 = vst [vmem:[%s165 + $0xf0] sm:$0xf8] %v379
        %482 = vst [vmem:[%s165 + $0xf8] sm:$0xf8] %v380
        %483 = vst [vmem:[%s165 + $0x100] sm:$0xf8] %v381
        %vm484 = vcmask 556035
        %485 = vst.msk [vmem:[%s165 + $0x108] sm:$0xf8] %vm484, %v382
        %486 = vst [vmem:[%s165 + $0x110] sm:$0xff] %v384
        %487 = vst [vmem:[%s165 + $0x118] sm:$0xff] %v386
        %488 = vst [vmem:[%s165 + $0x120] sm:$0xff] %v388
        %489 = vst [vmem:[%s165 + $0x128] sm:$0xff] %v390
        %490 = vst [vmem:[%s165 + $0x130] sm:$0xff] %v392
        %491 = vst [vmem:[%s165 + $0x138] sm:$0xff] %v394
        %492 = vst [vmem:[%s165 + $0x140] sm:$0xff] %v396
        %493 = vst [vmem:[%s165 + $0x148] sm:$0xff] %v398
        %494 = vst [vmem:[%s165 + $0x150] sm:$0xff] %v400
        %495 = vst [vmem:[%s165 + $0x158] sm:$0xff] %v402
        %496 = vst [vmem:[%s165 + $0x160] sm:$0xff] %v404
        %497 = vst [vmem:[%s165 + $0x168] sm:$0xff] %v406
        %498 = vst [vmem:[%s165 + $0x170] sm:$0xff] %v408
        %499 = vst [vmem:[%s165 + $0x178] sm:$0xff] %v410
        %500 = vst [vmem:[%s165 + $0x180] sm:$0xff] %v412
        %501 = vst [vmem:[%s165 + $0x188] sm:$0xff] %v414
        %vm502 = vcmask 556032
        %503 = vst.msk [vmem:[%s165 + $0x190] sm:$0xff] %vm502, %v416
        %504 = vst [vmem:[%s165 + $0x198] sm:$0x7] %v383
        %505 = vst [vmem:[%s165 + $0x1a0] sm:$0x7] %v385
        %506 = vst [vmem:[%s165 + $0x1a8] sm:$0x7] %v387
        %507 = vst [vmem:[%s165 + $0x1b0] sm:$0x7] %v389
        %508 = vst [vmem:[%s165 + $0x1b8] sm:$0x7] %v391
        %509 = vst [vmem:[%s165 + $0x1c0] sm:$0x7] %v393
        %510 = vst [vmem:[%s165 + $0x1c8] sm:$0x7] %v395
        %511 = vst [vmem:[%s165 + $0x1d0] sm:$0x7] %v397
        %512 = vst [vmem:[%s165 + $0x1d8] sm:$0x7] %v399
        %513 = vst [vmem:[%s165 + $0x1e0] sm:$0x7] %v401
        %514 = vst [vmem:[%s165 + $0x1e8] sm:$0x7] %v403
        %515 = vst [vmem:[%s165 + $0x1f0] sm:$0x7] %v405
        %516 = vst [vmem:[%s165 + $0x1f8] sm:$0x7] %v407
        %517 = vst [vmem:[%s165 + $0x200] sm:$0x7] %v409
        %518 = vst [vmem:[%s165 + $0x208] sm:$0x7] %v411
        %519 = vst [vmem:[%s165 + $0x210] sm:$0x7] %v413
        %520 = vst.msk [vmem:[%s165 + $0x218] sm:$0x7] %vm295, %v415
        %p521 = scmp.lt.s32.totalorder %s15, 1
        %s522 = scalar_select %p521, %s15, 1
        %s523 = smul.addr %s522, 68
        %s524 = smul.addr %s523, 8
        %s525 = scalar_lea.vmem %s3, %s524
        // Predicated region
        $region37: #{tpu_custom_call.1} parent=31 // pred_check
          %p526 = pneg %p96
        $region38: #{tpu_custom_call.1} parent=31 // pred_check_branch
          %528 = sbr.rel (%p526) target = $region40
        $region39: #{tpu_custom_call.1} parent=31 // pred_region
          _
        $region40: #{tpu_custom_call.1} parent=31 // pred_fallthru
          _
      $region32: #{tpu_custom_call.1} parent=5 // pred_fallthru
        _
      %p529 = scmp.le.s32.totalorder 2, %s10
      // Predicated region
      $region41: #{tpu_custom_call.1} parent=5 // pred_check
        %p530 = pneg %p529
      $region42: #{tpu_custom_call.1} parent=5 // pred_check_branch
        %532 = sbr.rel (%p530) target = $region44
      $region43: #{tpu_custom_call.1} parent=5 // pred_region
        %s533 = ssub.s32 %s10, 2
        // Predicated region
        $region45: #{tpu_custom_call.1} parent=43 // pred_check
          %p534 = pneg %p102
        $region46: #{tpu_custom_call.1} parent=43 // pred_check_branch
          %536 = sbr.rel (%p534) target = $region48
        $region47: #{tpu_custom_call.1} parent=43 // pred_region
          %p537 = scmp.lt.s32.totalorder %s16, 1
          %s538 = scalar_select %p537, %s16, 1
          %s539 = smul.addr %s538, 68
          %s540 = smul.addr %s539, 8
          %s541 = scalar_lea.vmem %s3, %s540
        $region48: #{tpu_custom_call.1} parent=43 // pred_fallthru
          _
      $region44: #{tpu_custom_call.1} parent=5 // pred_fallthru
        _
    $region6: #{tpu_custom_call.1} parent=1 // loop_footer
      %s14 = sadd.s32 1, %s10
    $region7: #{tpu_custom_call.1} parent=1 // loop_footer_branch
      %9 = sbr.rel target = $region3
    $region8: #{tpu_custom_call.1} parent=1 // loop_exit
      _
    %542 = vsyncpa [#allocation3], 1
    %s543 = scalar_lea.sflag [#allocation3], 1
    %544 = vsyncpa %s543, 1

</llo_original>
